<compile_context>
chip_gen: v6e
topology: v6e:2x2x1
jax: 0.10.0
libtpu: 0.0.40
codegen_flags: <defaults>
</compile_context>

<pallas_src>
import jax
import jax.numpy as jnp
from jax.experimental import pallas as pl
from jax.experimental.pallas import tpu as pltpu


_LANE = 128
_MAX_BATCH_TILE = 256  # weight is resident, so large batch tiles are cheap


def _round_up(x, m):
    return (x + m - 1) // m * m


def _linear_kernel(x_ref, w_ref, b_ref, o_ref):
    # x_ref: (tb, in_pad)            f32, lane-dense
    # w_ref: (out_features, in_pad)  f32, natural PyTorch layout (no padding)
    # b_ref: (1, out_features)       f32
    # o_ref: (tb, out_features)      f32
    acc = jax.lax.dot_general(
        x_ref[...],
        w_ref[...],
        dimension_numbers=(((1,), (1,)), ((), ())),  # contract in_features (NT)
        preferred_element_type=jnp.float32,
    )
    o_ref[...] = acc + b_ref[...]  # f32 epilogue (v5e-friendly)


def prepare_classifier_params(weight_pt, bias):
    """One-time parameter prep, hoisted out of the per-call path.

    Keeps W in the natural (out, in) layout; only pads K if in_features is not
    a 128 multiple (no-op for in_features = 1024).  Bias is reshaped once.
    """
    out_features, in_features = weight_pt.shape
    in_pad = _round_up(in_features, _LANE)
    w = weight_pt
    if in_pad != in_features:  # zero-padding K leaves the product unchanged
        w = jnp.pad(w, ((0, 0), (0, in_pad - in_features)))
    b2d = bias.reshape(1, out_features).astype(jnp.float32)
    return w.astype(jnp.float32), b2d


def classifier_forward(x_nchw, w_prepped, b2d):
    """Flatten + Linear; matmul + bias fused in one Pallas kernel.

    x_nchw:    (B, C, H, W) float32
    w_prepped: (out_features, in_pad) float32   (from prepare_classifier_params)
    b2d:       (1, out_features) float32
    returns:   (B, out_features) float32
    """
    B = x_nchw.shape[0]
    out_features = b2d.shape[1]
    in_pad = w_prepped.shape[1]

    in_features = 1
    for d in x_nchw.shape[1:]:
        in_features *= d

    # ---- per-call glue: flatten (view) + K-pad only when needed ----
    x2d = x_nchw.reshape(B, in_features)
    if in_pad != in_features:
        x2d = jnp.pad(x2d, ((0, 0), (0, in_pad - in_features)))

    # ---- batch tiling: no pad when B fits one tile ----
    if B <= _MAX_BATCH_TILE:
        tb = B          # block sublane dim == full array dim -> legal
        b_pad = B
    else:
        tb = _MAX_BATCH_TILE
        b_pad = _round_up(B, tb)
        if b_pad != B:
            x2d = jnp.pad(x2d, ((0, b_pad - B), (0, 0)))

    grid = (b_pad // tb,)

    # Honest cost estimate from the real (unpadded) streams.
    cost = pl.CostEstimate(
        flops=2 * B * in_features * out_features,
        transcendentals=0,
        bytes_accessed=4 * (B * in_features
                            + out_features * in_features
                            + B * out_features
                            + out_features),
    )

    out = pl.pallas_call(
        _linear_kernel,
        out_shape=jax.ShapeDtypeStruct((b_pad, out_features), jnp.float32),
        grid=grid,
        in_specs=[
            pl.BlockSpec((tb, in_pad), lambda i: (i, 0)),            # x batch tile
            pl.BlockSpec((out_features, in_pad), lambda i: (0, 0)),  # full weight, resident
            pl.BlockSpec((1, out_features), lambda i: (0, 0)),       # bias row
        ],
        out_specs=pl.BlockSpec((tb, out_features), lambda i: (i, 0)),
        compiler_params=pltpu.CompilerParams(
            dimension_semantics=("parallel",),  # batch tiles -> 2-TC split on v7x
        ),
        cost_estimate=cost,
    )(x2d, w_prepped, b2d)

    if b_pad != B:
        out = out[:B]
    return out


if __name__ == "__main__":
    # Shapes consistent with Flatten + Linear:
    #   x: (B=2, C=4, H=16, W=16) -> in_features = 4*16*16 = 1024
    #   out_features = 32
    B, C, H, W = 2, 4, 16, 16
    in_features = C * H * W
    out_features = 32

    key = jax.random.PRNGKey(0)
    kx, kw, kb = jax.random.split(key, 3)

    x = jax.random.normal(kx, (B, C, H, W), dtype=jnp.float32)

    bound = 1.0 / jnp.sqrt(jnp.float32(in_features))
    weight_pt = jax.random.uniform(
        kw, (out_features, in_features), minval=-bound, maxval=bound,
        dtype=jnp.float32,
    )  # PyTorch convention (out, in) — kept as-is, no transpose, no out-padding
    bias = jax.random.uniform(
        kb, (out_features,), minval=-bound, maxval=bound, dtype=jnp.float32
    )

    # One-time parameter prep (hoisted out of the per-call path).
    w_prepped, b2d = prepare_classifier_params(weight_pt, bias)

    fwd = jax.jit(classifier_forward)
    out = fwd(x, w_prepped, b2d)
    out = jax.block_until_ready(out)

    # Reference check in plain JAX (same math as PyTorch Linear on flattened x)
    ref = x.reshape(B, in_features) @ weight_pt.T + bias
    assert out.shape == (B, out_features), out.shape
    assert jnp.allclose(out, ref, atol=1e-4, rtol=1e-4)

    print("KERNEL_OK")
</pallas_src>

<mosaic_0001>
module attributes {stable_mosaic.version = 11 : i64} {
  func.func @_linear_kernel(%arg0: i32, %arg1: memref<2x1024xf32, #tpu.memory_space<vmem>>, %arg2: memref<32x1024xf32, #tpu.memory_space<vmem>>, %arg3: memref<1x32xf32, #tpu.memory_space<vmem>>, %arg4: memref<2x32xf32, #tpu.memory_space<vmem>>) attributes {dimension_semantics = [#tpu.dimension_semantics<parallel>], iteration_bounds = array<i64: 1>, scalar_prefetch = 0 : i64, scratch_operands = 0 : i64, tpu.core_type = #tpu.core_type<tc>, window_params = [{transform_indices = @transform_0, window_bounds = array<i64: 2, 1024>}, {pipeline_mode = #tpu.pipeline_mode<synchronous>, transform_indices = @transform_1, window_bounds = array<i64: 32, 1024>}, {pipeline_mode = #tpu.pipeline_mode<synchronous>, transform_indices = @transform_2, window_bounds = array<i64: 1, 32>}, {transform_indices = @transform_3, window_bounds = array<i64: 2, 32>}]} {
    %c0 = arith.constant 0 : index
    %c0_0 = arith.constant 0 : index
    %0 = vector.load %arg1[%c0, %c0_0] : memref<2x1024xf32, #tpu.memory_space<vmem>>, vector<2x1024xf32>
    %c0_1 = arith.constant 0 : index
    %c0_2 = arith.constant 0 : index
    %1 = vector.load %arg2[%c0_1, %c0_2] : memref<32x1024xf32, #tpu.memory_space<vmem>>, vector<32x1024xf32>
    %cst = arith.constant dense<0.000000e+00> : vector<2x32xf32>
    %2 = tpu.matmul %0, %1, %cst {dimension_numbers = #tpu.dot_dimension_numbers<[1], [1], [0], [0], [0, 0, 1, 0], [], []>} : vector<2x1024xf32>, vector<32x1024xf32>, vector<2x32xf32> -> vector<2x32xf32>
    %c0_3 = arith.constant 0 : index
    %c0_4 = arith.constant 0 : index
    %3 = vector.load %arg3[%c0_3, %c0_4] : memref<1x32xf32, #tpu.memory_space<vmem>>, vector<1x32xf32>
    %4 = vector.broadcast %3 : vector<1x32xf32> to vector<2x32xf32>
    %5 = arith.addf %2, %4 : vector<2x32xf32>
    %c0_5 = arith.constant 0 : index
    %c0_6 = arith.constant 0 : index
    %6 = vector.load %arg4[%c0_5, %c0_6] : memref<2x32xf32, #tpu.memory_space<vmem>>, vector<2x32xf32>
    tpu.vector_store %arg4[%c0_5, %c0_6], %5 {strides = array<i32>} : memref<2x32xf32, #tpu.memory_space<vmem>>, vector<2x32xf32>,
    return
  }
  func.func @transform_0(%arg0: i32) -> (i32, i32) {
    %c0_i32 = arith.constant 0 : i32
    %c0_i32_0 = arith.constant 0 : i32
    return %arg0, %c0_i32 : i32, i32
  }
  func.func @transform_1(%arg0: i32) -> (i32, i32) {
    %c0_i32 = arith.constant 0 : i32
    %c0_i32_0 = arith.constant 0 : i32
    %c0_i32_1 = arith.constant 0 : i32
    return %c0_i32, %c0_i32_0 : i32, i32
  }
  func.func @transform_2(%arg0: i32) -> (i32, i32) {
    %c0_i32 = arith.constant 0 : i32
    %c0_i32_0 = arith.constant 0 : i32
    %c0_i32_1 = arith.constant 0 : i32
    return %c0_i32, %c0_i32_0 : i32, i32
  }
  func.func @transform_3(%arg0: i32) -> (i32, i32) {
    %c0_i32 = arith.constant 0 : i32
    %c0_i32_0 = arith.constant 0 : i32
    return %arg0, %c0_i32 : i32, i32
  }
}

</mosaic_0001>

<llo_original>
// kernel: classifier_forward.1
$region0: #{classifier_forward.1}
  #allocation0 [shape = 'u32[]', space=smem, size = 0x4, offset = 0x4, fixed_abs, tag = 'smem constant byte address 0x4 - core index']
  #allocation1 [shape = 'u32[144,128]{1,0:T(1,128)}', space=vmem, size = 0x12000, scoped, tag = 'internal scratch']
  %s0 = inlined_call_operand.vmem [shape: f32[2,1024], index: 0, kind: input, shape index: {}]
  %s1 = inlined_call_operand.hbm [shape: f32[32,1024], index: 1, kind: input, shape index: {}]
  %s2 = inlined_call_operand.vmem [shape: f32[1,32], index: 2, kind: input, shape index: {}]
  %s3 = inlined_call_operand.hbm [shape: f32[2,32], index: 3, kind: output, shape index: {}]
  %s4 = sld [smem:[#allocation0]]
  $region26: #{classifier_forward.1} parent=0
    _
  %s6 = ssub.s32 1, %s4
  %s7 = scalar_select 0, %s6, %s4
  $region1: #{classifier_forward.1} parent=0
    #allocation2 [shape = 'u8[131072]{0}', space=vmem, size = 0x20000, scoped, tag = 'input window, operand 1, single buffered']
    #allocation3 [shape = 's32[1]{0}', space=sflag, size = 0x4, scoped, tag = 'scoped memory for classifier_forward.1']
    #allocation4 [shape = 's32[1]{0}', space=sflag, size = 0x4, scoped, tag = 'scoped memory for classifier_forward.1']
    #allocation5 [shape = 'u8[1024]{0}', space=vmem, size = 0x400, scoped, tag = 'output window, operand 0, single buffered']
    %8 = vsyncpa [#allocation3], 0
    %9 = vsyncpa [#allocation4], 0
    // Predicated region
    $region2: #{classifier_forward.1} parent=1 // pred_check
      _
    $region3: #{classifier_forward.1} parent=1 // pred_check_branch
      %11 = sbr.rel (0) target = $region5
    $region4: #{classifier_forward.1} parent=1 // pred_region
      _
    $region5: #{classifier_forward.1} parent=1 // pred_fallthru
      _
    // Predicated region
    $region6: #{classifier_forward.1} parent=1 // pred_check
      _
    $region7: #{classifier_forward.1} parent=1 // pred_check_branch
      %13 = sbr.rel (0) target = $region9
    $region8: #{classifier_forward.1} parent=1 // pred_region
      %s15 = ssub.s32 4096, 4096
      %16 = vsyncadd [#allocation3], %s15
      %s17 = sshll.u32 [#allocation2], 4
      %s18 = int_to_ptr.vmem [resolvable:$true] %s17
      %23 = dma.hbm_to_vmem [thread:$0]  %s1, 4096, %s18, [#allocation3], 1024, 1024, 64
    $region9: #{classifier_forward.1} parent=1 // pred_fallthru
      _
    // Predicated region
    $region10: #{classifier_forward.1} parent=1 // pred_check
      _
    $region11: #{classifier_forward.1} parent=1 // pred_check_branch
      %25 = sbr.rel (0) target = $region13
    $region12: #{classifier_forward.1} parent=1 // pred_region
      _
    $region13: #{classifier_forward.1} parent=1 // pred_fallthru
      _
    // Predicated region
    $region14: #{classifier_forward.1} parent=1 // pred_check
      _
    $region15: #{classifier_forward.1} parent=1 // pred_check_branch
      %27 = sbr.rel (0) target = $region17
    $region16: #{classifier_forward.1} parent=1 // pred_region
      %28 = dma.done [#allocation3], 4096
    $region17: #{classifier_forward.1} parent=1 // pred_fallthru
      _
    %v29 = vld [vmem:[%s0] sm:$0xff]
    %v30 = vld [vmem:[%s0 + $0x8] sm:$0xff]
    %v31 = vld [vmem:[#allocation2] sm:$0xff]
    %v32 = vld [vmem:[#allocation2 + $0x8] sm:$0xff]
    %v33 = vld [vmem:[#allocation2 + $0x10] sm:$0xff]
    %v34 = vld [vmem:[#allocation2 + $0x18] sm:$0xff]
    %v35 = vld [vmem:[#allocation2 + $0x20] sm:$0xff]
    %v36 = vld [vmem:[#allocation2 + $0x28] sm:$0xff]
    %v37 = vld [vmem:[#allocation2 + $0x30] sm:$0xff]
    %v38 = vld [vmem:[#allocation2 + $0x38] sm:$0xff]
    %v39 = vld [vmem:[#allocation2 + $0x40] sm:$0xff]
    %v40 = vld [vmem:[#allocation2 + $0x48] sm:$0xff]
    %v41 = vld [vmem:[#allocation2 + $0x50] sm:$0xff]
    %v42 = vld [vmem:[#allocation2 + $0x58] sm:$0xff]
    %v43 = vld [vmem:[#allocation2 + $0x60] sm:$0xff]
    %v44 = vld [vmem:[#allocation2 + $0x68] sm:$0xff]
    %v45 = vld [vmem:[#allocation2 + $0x70] sm:$0xff]
    %v46 = vld [vmem:[#allocation2 + $0x78] sm:$0xff]
    %v47 = vld [vmem:[#allocation2 + $0x80] sm:$0xff]
    %v48 = vld [vmem:[#allocation2 + $0x88] sm:$0xff]
    %v49 = vld [vmem:[#allocation2 + $0x90] sm:$0xff]
    %v50 = vld [vmem:[#allocation2 + $0x98] sm:$0xff]
    %v51 = vld [vmem:[#allocation2 + $0xa0] sm:$0xff]
    %v52 = vld [vmem:[#allocation2 + $0xa8] sm:$0xff]
    %v53 = vld [vmem:[#allocation2 + $0xb0] sm:$0xff]
    %v54 = vld [vmem:[#allocation2 + $0xb8] sm:$0xff]
    %v55 = vld [vmem:[#allocation2 + $0xc0] sm:$0xff]
    %v56 = vld [vmem:[#allocation2 + $0xc8] sm:$0xff]
    %v57 = vld [vmem:[#allocation2 + $0xd0] sm:$0xff]
    %v58 = vld [vmem:[#allocation2 + $0xd8] sm:$0xff]
    %v59 = vld [vmem:[#allocation2 + $0xe0] sm:$0xff]
    %v60 = vld [vmem:[#allocation2 + $0xe8] sm:$0xff]
    %v61 = vld [vmem:[#allocation2 + $0xf0] sm:$0xff]
    %v62 = vld [vmem:[#allocation2 + $0xf8] sm:$0xff]
    %v63 = vld [vmem:[%s2] sm:$0x1]
    %v65 = vlaneseq
    %v66 = vshrl.u32 %v65, 7
    %v67 = vsub.s32 0, %v66
    %v68 = vrot.slane %v63, %v67
    %v72 = vcombine.high %v29, %v29
    %v74 = vunpack.c.l.s4 1983009808
    %v75 = vunpack.c.0.s8 %v74
    %v76 = vlaneseq
    %v77 = vshrl.u32 %v76, 7
    %v78 = vsub.s32 %v75, %v77
    %v79 = vrot.slane %v29, %v78
    %v81 = vunpack.c.l.s4 1983009808
    %v82 = vunpack.c.0.s8 %v81
    %v83 = vlaneseq
    %v84 = vshrl.u32 %v83, 7
    %v85 = vsub.s32 %v82, %v84
    %v86 = vrot.slane %v72, %v85
    %v87 = vcombine.high %v79, %v79
    %v88 = vcombine.high %v86, %v86
    %v89 = vcombine.high %v30, %v30
    %v91 = vunpack.c.l.s4 1983009808
    %v92 = vunpack.c.0.s8 %v91
    %v93 = vlaneseq
    %v94 = vshrl.u32 %v93, 7
    %v95 = vsub.s32 %v92, %v94
    %v96 = vrot.slane %v30, %v95
    %v98 = vunpack.c.l.s4 1983009808
    %v99 = vunpack.c.0.s8 %v98
    %v100 = vlaneseq
    %v101 = vshrl.u32 %v100, 7
    %v102 = vsub.s32 %v99, %v101
    %v103 = vrot.slane %v89, %v102
    %v104 = vcombine.high %v96, %v96
    %v105 = vcombine.high %v103, %v103
    %114 = vmatprep.subr.mxu0 0.0
    %115 = vmatpush1.xpose.msra.mxu0 0.0
    %116 = vmatprep.subr.mxu0 0.0
    %117 = vmatpush1.xpose.msra.mxu0 0.0
    %118 = vmatprep.subr.mxu0 0.0
    %119 = vmatpush1.xpose.msra.mxu0 0.0
    %120 = vmatprep.subr.mxu0 0.0
    %121 = vmatpush1.xpose.msra.mxu0 0.0
    %122 = vmatprep.subr.mxu0 0.0
    %123 = vmatpush1.xpose.msra.mxu0 0.0
    %124 = vmatprep.subr.mxu0 0.0
    %125 = vmatpush1.xpose.msra.mxu0 0.0
    %126 = vmatprep.subr.mxu0 0.0
    %127 = vmatpush1.xpose.msra.mxu0 0.0
    %128 = vmatprep.subr.mxu0 0.0
    %129 = vmatpush1.xpose.msra.mxu0 0.0
    %130 = vmatprep.subr.mxu0 0.0
    %131 = vmatpush1.xpose.msra.mxu0 0.0
    %132 = vmatprep.subr.mxu0 0.0
    %133 = vmatpush1.xpose.msra.mxu0 0.0
    %134 = vmatprep.subr.mxu0 0.0
    %135 = vmatpush1.xpose.msra.mxu0 0.0
    %136 = vmatprep.subr.mxu0 0.0
    %137 = vmatpush1.xpose.msra.mxu0 0.0
    %138 = vmatprep.subr.mxu0 %v56
    %139 = vmatpush1.xpose.msra.mxu0 %v55
    %140 = vmatprep.subr.mxu0 %v48
    %141 = vmatpush1.xpose.msra.mxu0 %v47
    %142 = vmatprep.subr.mxu0 %v40
    %143 = vmatpush1.xpose.msra.mxu0 %v39
    %144 = vmatprep.subr.mxu0 %v32
    %145 = vmatpush1.xpose.msra.mxu0 %v31
    %146 = vmatprep.subr.mxu0 0.0
    %147 = vmatpush2.xpose.msra.mxu0 0.0
    %148 = vmatprep.subr.mxu0 0.0
    %149 = vmatpush2.xpose.msra.mxu0 0.0
    %150 = vmatprep.subr.mxu0 0.0
    %151 = vmatpush2.xpose.msra.mxu0 0.0
    %152 = vmatprep.subr.mxu0 0.0
    %153 = vmatpush2.xpose.msra.mxu0 0.0
    %154 = vmatprep.subr.mxu0 0.0
    %155 = vmatpush2.xpose.msra.mxu0 0.0
    %156 = vmatprep.subr.mxu0 0.0
    %157 = vmatpush2.xpose.msra.mxu0 0.0
    %158 = vmatprep.subr.mxu0 0.0
    %159 = vmatpush2.xpose.msra.mxu0 0.0
    %160 = vmatprep.subr.mxu0 0.0
    %161 = vmatpush2.xpose.msra.mxu0 0.0
    %162 = vmatprep.subr.mxu0 0.0
    %163 = vmatpush2.xpose.msra.mxu0 0.0
    %164 = vmatprep.subr.mxu0 0.0
    %165 = vmatpush2.xpose.msra.mxu0 0.0
    %166 = vmatprep.subr.mxu0 0.0
    %167 = vmatpush2.xpose.msra.mxu0 0.0
    %168 = vmatprep.subr.mxu0 0.0
    %169 = vmatpush2.xpose.msra.mxu0 0.0
    %170 = vmatprep.subr.mxu0 0.0
    %171 = vmatpush2.xpose.msra.mxu0 0.0
    %172 = vmatprep.subr.mxu0 0.0
    %173 = vmatpush2.xpose.msra.mxu0 0.0
    %174 = vmatprep.subr.mxu0 0.0
    %175 = vmatpush2.xpose.msra.mxu0 0.0
    %176 = vmatprep.subr.mxu0 0.0
    %177 = vmatpush2.xpose.msra.mxu0 0.0
    %178 = vmatprep.mubr.f32.mxu0 %v87
    %179 = vmatmul.mubr.f32.gmra.mxu0 %v79
    %v180 = vpop.f32.mrf.mxu0
    %v181 = vadd.f32 %v68, %v180
    %v182 = vpop.f32.mrf.mxu0
    %183 = vdwg.mxu0
    %184 = vmatprep.subr.mxu0 0.0
    %185 = vmatpush1.xpose.msra.mxu0 0.0
    %186 = vmatprep.subr.mxu0 0.0
    %187 = vmatpush1.xpose.msra.mxu0 0.0
    %188 = vmatprep.subr.mxu0 0.0
    %189 = vmatpush1.xpose.msra.mxu0 0.0
    %190 = vmatprep.subr.mxu0 0.0
    %191 = vmatpush1.xpose.msra.mxu0 0.0
    %192 = vmatprep.subr.mxu0 0.0
    %193 = vmatpush1.xpose.msra.mxu0 0.0
    %194 = vmatprep.subr.mxu0 0.0
    %195 = vmatpush1.xpose.msra.mxu0 0.0
    %196 = vmatprep.subr.mxu0 0.0
    %197 = vmatpush1.xpose.msra.mxu0 0.0
    %198 = vmatprep.subr.mxu0 0.0
    %199 = vmatpush1.xpose.msra.mxu0 0.0
    %200 = vmatprep.subr.mxu0 0.0
    %201 = vmatpush1.xpose.msra.mxu0 0.0
    %202 = vmatprep.subr.mxu0 0.0
    %203 = vmatpush1.xpose.msra.mxu0 0.0
    %204 = vmatprep.subr.mxu0 0.0
    %205 = vmatpush1.xpose.msra.mxu0 0.0
    %206 = vmatprep.subr.mxu0 0.0
    %207 = vmatpush1.xpose.msra.mxu0 0.0
    %208 = vmatprep.subr.mxu0 %v58
    %209 = vmatpush1.xpose.msra.mxu0 %v57
    %210 = vmatprep.subr.mxu0 %v50
    %211 = vmatpush1.xpose.msra.mxu0 %v49
    %212 = vmatprep.subr.mxu0 %v42
    %213 = vmatpush1.xpose.msra.mxu0 %v41
    %214 = vmatprep.subr.mxu0 %v34
    %215 = vmatpush1.xpose.msra.mxu0 %v33
    %216 = vmatprep.subr.mxu0 0.0
    %217 = vmatpush2.xpose.msra.mxu0 0.0
    %218 = vmatprep.subr.mxu0 0.0
    %219 = vmatpush2.xpose.msra.mxu0 0.0
    %220 = vmatprep.subr.mxu0 0.0
    %221 = vmatpush2.xpose.msra.mxu0 0.0
    %222 = vmatprep.subr.mxu0 0.0
    %223 = vmatpush2.xpose.msra.mxu0 0.0
    %224 = vmatprep.subr.mxu0 0.0
    %225 = vmatpush2.xpose.msra.mxu0 0.0
    %226 = vmatprep.subr.mxu0 0.0
    %227 = vmatpush2.xpose.msra.mxu0 0.0
    %228 = vmatprep.subr.mxu0 0.0
    %229 = vmatpush2.xpose.msra.mxu0 0.0
    %230 = vmatprep.subr.mxu0 0.0
    %231 = vmatpush2.xpose.msra.mxu0 0.0
    %232 = vmatprep.subr.mxu0 0.0
    %233 = vmatpush2.xpose.msra.mxu0 0.0
    %234 = vmatprep.subr.mxu0 0.0
    %235 = vmatpush2.xpose.msra.mxu0 0.0
    %236 = vmatprep.subr.mxu0 0.0
    %237 = vmatpush2.xpose.msra.mxu0 0.0
    %238 = vmatprep.subr.mxu0 0.0
    %239 = vmatpush2.xpose.msra.mxu0 0.0
    %240 = vmatprep.subr.mxu0 0.0
    %241 = vmatpush2.xpose.msra.mxu0 0.0
    %242 = vmatprep.subr.mxu0 0.0
    %243 = vmatpush2.xpose.msra.mxu0 0.0
    %244 = vmatprep.subr.mxu0 0.0
    %245 = vmatpush2.xpose.msra.mxu0 0.0
    %246 = vmatprep.subr.mxu0 0.0
    %247 = vmatpush2.xpose.msra.mxu0 0.0
    %248 = vmatprep.mubr.f32.mxu0 %v88
    %249 = vmatmul.mubr.f32.gmra.mxu0 %v86
    %v250 = vpop.f32.mrf.mxu0
    %v251 = vadd.f32 %v181, %v250
    %v252 = vpop.f32.mrf.mxu0
    %253 = vdwg.mxu0
    %254 = vmatprep.subr.mxu0 0.0
    %255 = vmatpush1.xpose.msra.mxu0 0.0
    %256 = vmatprep.subr.mxu0 0.0
    %257 = vmatpush1.xpose.msra.mxu0 0.0
    %258 = vmatprep.subr.mxu0 0.0
    %259 = vmatpush1.xpose.msra.mxu0 0.0
    %260 = vmatprep.subr.mxu0 0.0
    %261 = vmatpush1.xpose.msra.mxu0 0.0
    %262 = vmatprep.subr.mxu0 0.0
    %263 = vmatpush1.xpose.msra.mxu0 0.0
    %264 = vmatprep.subr.mxu0 0.0
    %265 = vmatpush1.xpose.msra.mxu0 0.0
    %266 = vmatprep.subr.mxu0 0.0
    %267 = vmatpush1.xpose.msra.mxu0 0.0
    %268 = vmatprep.subr.mxu0 0.0
    %269 = vmatpush1.xpose.msra.mxu0 0.0
    %270 = vmatprep.subr.mxu0 0.0
    %271 = vmatpush1.xpose.msra.mxu0 0.0
    %272 = vmatprep.subr.mxu0 0.0
    %273 = vmatpush1.xpose.msra.mxu0 0.0
    %274 = vmatprep.subr.mxu0 0.0
    %275 = vmatpush1.xpose.msra.mxu0 0.0
    %276 = vmatprep.subr.mxu0 0.0
    %277 = vmatpush1.xpose.msra.mxu0 0.0
    %278 = vmatprep.subr.mxu0 %v60
    %279 = vmatpush1.xpose.msra.mxu0 %v59
    %280 = vmatprep.subr.mxu0 %v52
    %281 = vmatpush1.xpose.msra.mxu0 %v51
    %282 = vmatprep.subr.mxu0 %v44
    %283 = vmatpush1.xpose.msra.mxu0 %v43
    %284 = vmatprep.subr.mxu0 %v36
    %285 = vmatpush1.xpose.msra.mxu0 %v35
    %286 = vmatprep.subr.mxu0 0.0
    %287 = vmatpush2.xpose.msra.mxu0 0.0
    %288 = vmatprep.subr.mxu0 0.0
    %289 = vmatpush2.xpose.msra.mxu0 0.0
    %290 = vmatprep.subr.mxu0 0.0
    %291 = vmatpush2.xpose.msra.mxu0 0.0
    %292 = vmatprep.subr.mxu0 0.0
    %293 = vmatpush2.xpose.msra.mxu0 0.0
    %294 = vmatprep.subr.mxu0 0.0
    %295 = vmatpush2.xpose.msra.mxu0 0.0
    %296 = vmatprep.subr.mxu0 0.0
    %297 = vmatpush2.xpose.msra.mxu0 0.0
    %298 = vmatprep.subr.mxu0 0.0
    %299 = vmatpush2.xpose.msra.mxu0 0.0
    %300 = vmatprep.subr.mxu0 0.0
    %301 = vmatpush2.xpose.msra.mxu0 0.0
    %302 = vmatprep.subr.mxu0 0.0
    %303 = vmatpush2.xpose.msra.mxu0 0.0
    %304 = vmatprep.subr.mxu0 0.0
    %305 = vmatpush2.xpose.msra.mxu0 0.0
    %306 = vmatprep.subr.mxu0 0.0
    %307 = vmatpush2.xpose.msra.mxu0 0.0
    %308 = vmatprep.subr.mxu0 0.0
    %309 = vmatpush2.xpose.msra.mxu0 0.0
    %310 = vmatprep.subr.mxu0 0.0
    %311 = vmatpush2.xpose.msra.mxu0 0.0
    %312 = vmatprep.subr.mxu0 0.0
    %313 = vmatpush2.xpose.msra.mxu0 0.0
    %314 = vmatprep.subr.mxu0 0.0
    %315 = vmatpush2.xpose.msra.mxu0 0.0
    %316 = vmatprep.subr.mxu0 0.0
    %317 = vmatpush2.xpose.msra.mxu0 0.0
    %318 = vmatprep.mubr.f32.mxu0 %v104
    %319 = vmatmul.mubr.f32.gmra.mxu0 %v96
    %v320 = vpop.f32.mrf.mxu0
    %v321 = vadd.f32 %v251, %v320
    %v322 = vpop.f32.mrf.mxu0
    %323 = vdwg.mxu0
    %324 = vmatprep.subr.mxu0 0.0
    %325 = vmatpush1.xpose.msra.mxu0 0.0
    %326 = vmatprep.subr.mxu0 0.0
    %327 = vmatpush1.xpose.msra.mxu0 0.0
    %328 = vmatprep.subr.mxu0 0.0
    %329 = vmatpush1.xpose.msra.mxu0 0.0
    %330 = vmatprep.subr.mxu0 0.0
    %331 = vmatpush1.xpose.msra.mxu0 0.0
    %332 = vmatprep.subr.mxu0 0.0
    %333 = vmatpush1.xpose.msra.mxu0 0.0
    %334 = vmatprep.subr.mxu0 0.0
    %335 = vmatpush1.xpose.msra.mxu0 0.0
    %336 = vmatprep.subr.mxu0 0.0
    %337 = vmatpush1.xpose.msra.mxu0 0.0
    %338 = vmatprep.subr.mxu0 0.0
    %339 = vmatpush1.xpose.msra.mxu0 0.0
    %340 = vmatprep.subr.mxu0 0.0
    %341 = vmatpush1.xpose.msra.mxu0 0.0
    %342 = vmatprep.subr.mxu0 0.0
    %343 = vmatpush1.xpose.msra.mxu0 0.0
    %344 = vmatprep.subr.mxu0 0.0
    %345 = vmatpush1.xpose.msra.mxu0 0.0
    %346 = vmatprep.subr.mxu0 0.0
    %347 = vmatpush1.xpose.msra.mxu0 0.0
    %348 = vmatprep.subr.mxu0 %v62
    %349 = vmatpush1.xpose.msra.mxu0 %v61
    %350 = vmatprep.subr.mxu0 %v54
    %351 = vmatpush1.xpose.msra.mxu0 %v53
    %352 = vmatprep.subr.mxu0 %v46
    %353 = vmatpush1.xpose.msra.mxu0 %v45
    %354 = vmatprep.subr.mxu0 %v38
    %355 = vmatpush1.xpose.msra.mxu0 %v37
    %356 = vmatprep.subr.mxu0 0.0
    %357 = vmatpush2.xpose.msra.mxu0 0.0
    %358 = vmatprep.subr.mxu0 0.0
    %359 = vmatpush2.xpose.msra.mxu0 0.0
    %360 = vmatprep.subr.mxu0 0.0
    %361 = vmatpush2.xpose.msra.mxu0 0.0
    %362 = vmatprep.subr.mxu0 0.0
    %363 = vmatpush2.xpose.msra.mxu0 0.0
    %364 = vmatprep.subr.mxu0 0.0
    %365 = vmatpush2.xpose.msra.mxu0 0.0
    %366 = vmatprep.subr.mxu0 0.0
    %367 = vmatpush2.xpose.msra.mxu0 0.0
    %368 = vmatprep.subr.mxu0 0.0
    %369 = vmatpush2.xpose.msra.mxu0 0.0
    %370 = vmatprep.subr.mxu0 0.0
    %371 = vmatpush2.xpose.msra.mxu0 0.0
    %372 = vmatprep.subr.mxu0 0.0
    %373 = vmatpush2.xpose.msra.mxu0 0.0
    %374 = vmatprep.subr.mxu0 0.0
    %375 = vmatpush2.xpose.msra.mxu0 0.0
    %376 = vmatprep.subr.mxu0 0.0
    %377 = vmatpush2.xpose.msra.mxu0 0.0
    %378 = vmatprep.subr.mxu0 0.0
    %379 = vmatpush2.xpose.msra.mxu0 0.0
    %380 = vmatprep.subr.mxu0 0.0
    %381 = vmatpush2.xpose.msra.mxu0 0.0
    %382 = vmatprep.subr.mxu0 0.0
    %383 = vmatpush2.xpose.msra.mxu0 0.0
    %384 = vmatprep.subr.mxu0 0.0
    %385 = vmatpush2.xpose.msra.mxu0 0.0
    %386 = vmatprep.subr.mxu0 0.0
    %387 = vmatpush2.xpose.msra.mxu0 0.0
    %388 = vmatprep.mubr.f32.mxu0 %v105
    %389 = vmatmul.mubr.f32.gmra.mxu0 %v103
    %v390 = vpop.f32.mrf.mxu0
    %v391 = vadd.f32 %v321, %v390
    %v392 = vpop.f32.mrf.mxu0
    %393 = vdwg.mxu0
    %vm394 = vcmask 254976
    %395 = vst.msk [vmem:[#allocation5] sm:$0x3] %vm394, %v391
    // Predicated region
    $region18: #{classifier_forward.1} parent=1 // pred_check
      _
    $region19: #{classifier_forward.1} parent=1 // pred_check_branch
      %397 = sbr.rel (0) target = $region21
    $region20: #{classifier_forward.1} parent=1 // pred_region
      %s399 = ssub.s32 32, 32
      %400 = vsyncadd [#allocation4], %s399
      %s402 = sshll.u32 [#allocation5], 4
      %s403 = int_to_ptr.vmem [resolvable:$true] %s402
      %405 = dma.vmem_to_hbm [thread:$0]  %s403, 32, %s3, [#allocation4]
    $region21: #{classifier_forward.1} parent=1 // pred_fallthru
      _
    // Predicated region
    $region22: #{classifier_forward.1} parent=1 // pred_check
      _
    $region23: #{classifier_forward.1} parent=1 // pred_check_branch
      %407 = sbr.rel (0) target = $region25
    $region24: #{classifier_forward.1} parent=1 // pred_region
      %408 = dma.done [#allocation4], 32
    $region25: #{classifier_forward.1} parent=1 // pred_fallthru
      _
    %409 = vsyncpa [#allocation3], 1
    %410 = vsyncpa [#allocation4], 1

</llo_original>
